<compile_context>
chip_gen: v7x
topology: tpu7x:2x2x1
jax: 0.10.0
libtpu: 0.0.40
codegen_flags: <defaults>
</compile_context>

<pallas_src>
import math
import functools

import jax
import jax.numpy as jnp
from jax.experimental import pallas as pl
from jax.experimental.pallas import tpu as pltpu


# ---------------------------------------------------------------------------
# Pallas kernels
# ---------------------------------------------------------------------------
def stacked_linear_kernel(x_ref, w_ref, b_ref, o_ref, acc_ref):
    # x: (1, tr, tk) bf16; w: (1, tk, tn) bf16; b: (1, 1, tn) f32; o: (1, tr, tn) bf16
    kk = pl.program_id(3)

    @pl.when(kk == 0)
    def _():
        acc_ref[...] = jnp.zeros_like(acc_ref)

    acc_ref[...] += jnp.dot(x_ref[0], w_ref[0], preferred_element_type=jnp.float32)

    @pl.when(kk == pl.num_programs(3) - 1)
    def _():
        o_ref[0] = (acc_ref[...] + b_ref[0]).astype(o_ref.dtype)


def attn_kernel(q_ref, k_ref, v_ref, wc_ref, bc_ref, o_ref, attn_ref, acc_ref):
    # q: (1,1,tq,Dh) bf16; k/v: (1,1,S,Dh) bf16; wc: (1,Dh,D) bf16; bc: (1,D) f32
    # o: (1,tq,D) f32 (accumulated over the head grid axis); attn: (1,1,tq,S) f32
    h = pl.program_id(2)

    @pl.when(h == 0)
    def _():
        acc_ref[...] = jnp.zeros_like(acc_ref)

    q = q_ref[0, 0]                      # (tq, Dh) bf16, 1/sqrt(d_head) already folded in
    k = k_ref[0, 0]                      # (S,  Dh) bf16
    v = v_ref[0, 0]                      # (S,  Dh) bf16

    # QK^T on the MXU, f32 accumulation (contraction expressed directly, no k.T copy).
    s = jax.lax.dot_general(q, k, (((1,), (1,)), ((), ())),
                            preferred_element_type=jnp.float32)          # (tq, S)

    # Exact row softmax in f32 over the full kv row.
    m = jnp.max(s, axis=-1, keepdims=True)
    p = jnp.exp(s - m)
    l = jnp.sum(p, axis=-1, keepdims=True)
    inv_l = 1.0 / l                       # exact: emitted rows sum to 1
    attn_ref[0, 0] = p * inv_l            # f32 attention weights (module output)

    # PV with unnormalized probabilities (bf16 MXU operands), normalize the small
    # (tq, Dh) context once instead of the (tq, S) probability matrix.
    ctx = jnp.dot(p.astype(jnp.bfloat16), v, preferred_element_type=jnp.float32)
    ctx = ctx * inv_l                                                    # (tq, Dh) f32

    # Fused head-concat + w_concat projection: single MXU push per head, accumulated.
    acc_ref[...] += jnp.dot(ctx.astype(jnp.bfloat16), wc_ref[0],
                            preferred_element_type=jnp.float32)

    @pl.when(h == pl.num_programs(2) - 1)
    def _():
        o_ref[0] = acc_ref[...] + bc_ref[0]


# ---------------------------------------------------------------------------
# Wrappers
# ---------------------------------------------------------------------------
def _tile(dim, target):
    """Largest tile <= target that divides dim (falls back to the full dim)."""
    if dim <= target:
        return dim
    for t in range(target, 0, -1):
        if dim % t == 0:
            return t
    return dim


def pallas_stacked_linear(x, w, b, *, max_row_tile=256, max_n_tile=512, max_k_tile=512):
    """x: (T, R, Din) bf16; w: (T, Din, Dout) bf16 (pre-transposed); b: (T, 1, Dout) f32.
    Returns (T, R, Dout) bf16."""
    T, R, Din = x.shape
    Dout = w.shape[2]
    tr = _tile(R, max_row_tile)
    tn = _tile(Dout, max_n_tile)
    tk = _tile(Din, max_k_tile)
    grid = (T, R // tr, Dout // tn, Din // tk)
    return pl.pallas_call(
        stacked_linear_kernel,
        out_shape=jax.ShapeDtypeStruct((T, R, Dout), jnp.bfloat16),
        grid=grid,
        in_specs=[
            pl.BlockSpec((1, tr, tk), lambda t, i, j, kk: (t, i, kk)),
            pl.BlockSpec((1, tk, tn), lambda t, i, j, kk: (t, kk, j)),
            pl.BlockSpec((1, 1, tn), lambda t, i, j, kk: (t, 0, j)),
        ],
        out_specs=pl.BlockSpec((1, tr, tn), lambda t, i, j, kk: (t, i, j)),
        scratch_shapes=[pltpu.VMEM((tr, tn), jnp.float32)],
        compiler_params=pltpu.CompilerParams(
            dimension_semantics=("parallel", "parallel", "parallel", "arbitrary"),
            vmem_limit_bytes=32 * 1024 * 1024,
        ),
    )(x, w, b)


def pallas_attention(qh, kh, vh, wc_heads, bc, *, max_q_tile=256):
    """qh/kh/vh: (B, H, S, Dh) bf16; wc_heads: (H, Dh, D) bf16; bc: (1, D) f32.
    Returns out (B, S, D) f32 (already concat + w_concat projected) and attn (B,H,S,S) f32."""
    B, H, S, Dh = qh.shape
    D = wc_heads.shape[1] * H
    tq = _tile(S, max_q_tile)
    grid = (B, S // tq, H)                       # head axis last = output-proj reduction
    out, attn = pl.pallas_call(
        attn_kernel,
        out_shape=(
            jax.ShapeDtypeStruct((B, S, D), jnp.float32),
            jax.ShapeDtypeStruct((B, H, S, S), jnp.float32),
        ),
        grid=grid,
        in_specs=[
            pl.BlockSpec((1, 1, tq, Dh), lambda b, i, h: (b, h, i, 0)),
            pl.BlockSpec((1, 1, S, Dh), lambda b, i, h: (b, h, 0, 0)),
            pl.BlockSpec((1, 1, S, Dh), lambda b, i, h: (b, h, 0, 0)),
            pl.BlockSpec((1, Dh, D), lambda b, i, h: (h, 0, 0)),
            pl.BlockSpec((1, D), lambda b, i, h: (0, 0)),
        ],
        out_specs=(
            pl.BlockSpec((1, tq, D), lambda b, i, h: (b, i, 0)),
            pl.BlockSpec((1, 1, tq, S), lambda b, i, h: (b, h, i, 0)),
        ),
        scratch_shapes=[pltpu.VMEM((tq, D), jnp.float32)],
        compiler_params=pltpu.CompilerParams(
            dimension_semantics=("parallel", "parallel", "arbitrary"),
            vmem_limit_bytes=32 * 1024 * 1024,
        ),
    )(qh, kh, vh, wc_heads, bc)
    return out, attn


@functools.partial(jax.jit, static_argnums=(4,))
def multi_head_attention(q, k, v, params, n_heads):
    """
    q, k, v: (seq_len, batch, d_model) f32
    returns: out (seq_len, batch, d_model) f32, attn (batch, n_heads, seq_len, seq_len) f32
    """
    S, B, D = q.shape
    H = n_heads
    Dh = D // H
    scale = 1.0 / math.sqrt(Dh)

    # ---- fused Q/K/V projection: one pallas_call, rows consumed (s,b)-major directly ----
    # (a per-row matmul is row-order invariant, so no input permutes are needed).
    x_stk = jnp.stack([q, k, v], axis=0).reshape(3, S * B, D).astype(jnp.bfloat16)
    # 1/sqrt(d_head) folded into w_q / b_q at trace time (free constant fold).
    w_stk = jnp.stack(
        [params["w_q"].T * scale, params["w_k"].T, params["w_v"].T], axis=0
    ).astype(jnp.bfloat16)                                                  # (3, D, D)
    b_stk = jnp.stack(
        [params["b_q"] * scale, params["b_k"], params["b_v"]], axis=0
    )[:, None, :]                                                           # (3, 1, D) f32
    qkv = pallas_stacked_linear(x_stk, w_stk, b_stk)                        # (3, S*B, D) bf16

    # Head split: (3, S*B, D) -> (3, B, H, S, Dh), bf16 (half the bytes of the old f32 path).
    # TODO(synk): for real sizes (Dh a multiple of 128) this transpose can be folded into the
    # attention BlockSpec index_maps; at Dh=8 lane-dim head slicing would violate the (8,128)
    # block constraint, so one XLA transpose is kept.
    qkv_h = qkv.reshape(3, S, B, H, Dh).transpose(0, 2, 3, 1, 4)
    qh, kh, vh = qkv_h[0], qkv_h[1], qkv_h[2]

    # w_concat pre-transposed and split by head along its input dim; fused into attn kernel.
    wc_heads = params["w_c"].T.reshape(H, Dh, D).astype(jnp.bfloat16)       # (H, Dh, D)
    bc = params["b_c"].reshape(1, D)                                        # (1, D) f32

    out_bsd, attn = pallas_attention(qh, kh, vh, wc_heads, bc)              # (B,S,D), (B,H,S,S)

    out = jnp.transpose(out_bsd, (1, 0, 2))                                 # (S, B, D)
    return out, attn


# ---------------------------------------------------------------------------
# Reference (plain JAX, full f32) for sanity checking
# ---------------------------------------------------------------------------
def reference_mha(q, k, v, params, n_heads):
    S, B, D = q.shape
    Dh = D // n_heads

    def lin(x, w, b):
        return x @ w.T + b

    qb = jnp.transpose(q, (1, 0, 2))
    kb = jnp.transpose(k, (1, 0, 2))
    vb = jnp.transpose(v, (1, 0, 2))
    qb = lin(qb, params["w_q"], params["b_q"])
    kb = lin(kb, params["w_k"], params["b_k"])
    vb = lin(vb, params["w_v"], params["b_v"])

    def split(x):
        return x.reshape(B, S, n_heads, Dh).transpose(0, 2, 1, 3)

    qh, kh, vh = split(qb), split(kb), split(vb)
    scores = jnp.einsum("bhqd,bhkd->bhqk", qh, kh) / math.sqrt(Dh)
    attn = jax.nn.softmax(scores, axis=-1)
    out = jnp.einsum("bhqk,bhkd->bhqd", attn, vh)
    out = out.transpose(0, 2, 1, 3).reshape(B, S, D)
    out = lin(out, params["w_c"], params["b_c"])
    return jnp.transpose(out, (1, 0, 2)), attn


# ---------------------------------------------------------------------------
# Main
# ---------------------------------------------------------------------------
if __name__ == "__main__":
    d_model = 32
    n_heads = 4
    seq_len = 8
    batch = 2

    key = jax.random.PRNGKey(0)
    keys = jax.random.split(key, 12)

    bound = 1.0 / math.sqrt(d_model)
    params = {
        "w_q": jax.random.uniform(keys[0], (d_model, d_model), jnp.float32, -bound, bound),
        "b_q": jax.random.uniform(keys[1], (d_model,), jnp.float32, -bound, bound),
        "w_k": jax.random.uniform(keys[2], (d_model, d_model), jnp.float32, -bound, bound),
        "b_k": jax.random.uniform(keys[3], (d_model,), jnp.float32, -bound, bound),
        "w_v": jax.random.uniform(keys[4], (d_model, d_model), jnp.float32, -bound, bound),
        "b_v": jax.random.uniform(keys[5], (d_model,), jnp.float32, -bound, bound),
        "w_c": jax.random.uniform(keys[6], (d_model, d_model), jnp.float32, -bound, bound),
        "b_c": jax.random.uniform(keys[7], (d_model,), jnp.float32, -bound, bound),
    }

    q = jax.random.normal(keys[8], (seq_len, batch, d_model), jnp.float32)
    k = jax.random.normal(keys[9], (seq_len, batch, d_model), jnp.float32)
    v = jax.random.normal(keys[10], (seq_len, batch, d_model), jnp.float32)

    out, attn = multi_head_attention(q, k, v, params, n_heads)
    out = jax.block_until_ready(out)
    attn = jax.block_until_ready(attn)

    out_ref, attn_ref = reference_mha(q, k, v, params, n_heads)
    assert out.shape == (seq_len, batch, d_model)
    assert attn.shape == (batch, n_heads, seq_len, seq_len)

    # Softmax normalization uses an exact reciprocal: rows sum to 1.
    assert jnp.allclose(jnp.sum(attn, axis=-1), 1.0, atol=1e-4)
    # Tolerances account for bf16 MXU operands (review-directed fast path); the reference
    # is full f32.  In f32 the same kernel structure agrees to ~1e-5.
    assert jnp.allclose(attn, attn_ref, atol=2e-2, rtol=2e-2)
    assert jnp.allclose(out, out_ref, atol=5e-2, rtol=5e-2)

    print("KERNEL_OK")
</pallas_src>

<mosaic_0001>
module attributes {stable_mosaic.version = 11 : i64} {
  func.func @stacked_linear_kernel(%arg0: i32, %arg1: i32, %arg2: i32, %arg3: i32, %arg4: memref<1x16x32xbf16, #tpu.memory_space<vmem>>, %arg5: memref<1x32x32xbf16, #tpu.memory_space<vmem>>, %arg6: memref<1x1x32xf32, #tpu.memory_space<vmem>>, %arg7: memref<1x16x32xbf16, #tpu.memory_space<vmem>>, %arg8: memref<16x32xf32, #tpu.memory_space<vmem>>) attributes {dimension_semantics = [#tpu.dimension_semantics<parallel>, #tpu.dimension_semantics<parallel>, #tpu.dimension_semantics<parallel>, #tpu.dimension_semantics<arbitrary>], iteration_bounds = array<i64: 3, 1, 1, 1>, scalar_prefetch = 0 : i64, scratch_operands = 1 : i64, tpu.core_type = #tpu.core_type<tc>, window_params = [{transform_indices = @transform_0, window_bounds = array<i64: 1, 16, 32>}, {transform_indices = @transform_1, window_bounds = array<i64: 1, 32, 32>}, {transform_indices = @transform_2, window_bounds = array<i64: 1, 1, 32>}, {transform_indices = @transform_3, window_bounds = array<i64: 1, 16, 32>}]} {
    %c0_i32 = arith.constant 0 : i32
    %0 = arith.cmpi eq, %arg3, %c0_i32 : i32
    %1 = arith.extui %0 : i1 to i32
    %c0_i32_0 = arith.constant 0 : i32
    %2 = arith.cmpi ne, %1, %c0_i32_0 : i32
    scf.if %2 {
      %cst_12 = arith.constant 0.000000e+00 : f32
      %14 = vector.broadcast %cst_12 : f32 to vector<16x32xf32>
      %c0_13 = arith.constant 0 : index
      %c0_14 = arith.constant 0 : index
      %15 = vector.load %arg8[%c0_13, %c0_14] : memref<16x32xf32, #tpu.memory_space<vmem>>, vector<16x32xf32>
      tpu.vector_store %arg8[%c0_13, %c0_14], %14 {strides = array<i32>} : memref<16x32xf32, #tpu.memory_space<vmem>>, vector<16x32xf32>,
    } else {
    }
    %c0 = arith.constant 0 : index
    %c0_1 = arith.constant 0 : index
    %3 = vector.load %arg8[%c0, %c0_1] : memref<16x32xf32, #tpu.memory_space<vmem>>, vector<16x32xf32>
    %c0_2 = arith.constant 0 : index
    %c0_3 = arith.constant 0 : index
    %c0_4 = arith.constant 0 : index
    %4 = vector.load %arg4[%c0_2, %c0_3, %c0_4] : memref<1x16x32xbf16, #tpu.memory_space<vmem>>, vector<1x16x32xbf16>
    %5 = vector.shape_cast %4 : vector<1x16x32xbf16> to vector<16x32xbf16>
    %c0_5 = arith.constant 0 : index
    %c0_6 = arith.constant 0 : index
    %c0_7 = arith.constant 0 : index
    %6 = vector.load %arg5[%c0_5, %c0_6, %c0_7] : memref<1x32x32xbf16, #tpu.memory_space<vmem>>, vector<1x32x32xbf16>
    %7 = vector.shape_cast %6 : vector<1x32x32xbf16> to vector<32x32xbf16>
    %cst = arith.constant dense<0.000000e+00> : vector<16x32xf32>
    %8 = tpu.matmul %5, %7, %cst {dimension_numbers = #tpu.dot_dimension_numbers<[1], [0], [0], [1], [0, 0, 1, 1], [], []>} : vector<16x32xbf16>, vector<32x32xbf16>, vector<16x32xf32> -> vector<16x32xf32>
    %9 = arith.addf %3, %8 : vector<16x32xf32>
    %c0_8 = arith.constant 0 : index
    %c0_9 = arith.constant 0 : index
    %10 = vector.load %arg8[%c0_8, %c0_9] : memref<16x32xf32, #tpu.memory_space<vmem>>, vector<16x32xf32>
    tpu.vector_store %arg8[%c0_8, %c0_9], %9 {strides = array<i32>} : memref<16x32xf32, #tpu.memory_space<vmem>>, vector<16x32xf32>,
    %c0_i32_10 = arith.constant 0 : i32
    %11 = arith.cmpi eq, %arg3, %c0_i32_10 : i32
    %12 = arith.extui %11 : i1 to i32
    %c0_i32_11 = arith.constant 0 : i32
    %13 = arith.cmpi ne, %12, %c0_i32_11 : i32
    scf.if %13 {
      %c0_12 = arith.constant 0 : index
      %c0_13 = arith.constant 0 : index
      %14 = vector.load %arg8[%c0_12, %c0_13] : memref<16x32xf32, #tpu.memory_space<vmem>>, vector<16x32xf32>
      %c0_14 = arith.constant 0 : index
      %c0_15 = arith.constant 0 : index
      %c0_16 = arith.constant 0 : index
      %15 = vector.load %arg6[%c0_14, %c0_15, %c0_16] : memref<1x1x32xf32, #tpu.memory_space<vmem>>, vector<1x1x32xf32>
      %16 = vector.shape_cast %15 : vector<1x1x32xf32> to vector<1x32xf32>
      %17 = vector.broadcast %16 : vector<1x32xf32> to vector<16x32xf32>
      %18 = arith.addf %14, %17 : vector<16x32xf32>
      %19 = arith.truncf %18 : vector<16x32xf32> to vector<16x32xbf16>
      %c0_17 = arith.constant 0 : index
      %c0_18 = arith.constant 0 : index
      %c0_19 = arith.constant 0 : index
      %20 = vector.load %arg7[%c0_17, %c0_18, %c0_19] : memref<1x16x32xbf16, #tpu.memory_space<vmem>>, vector<1x16x32xbf16>
      %21 = vector.shape_cast %20 : vector<1x16x32xbf16> to vector<16x32xbf16>
      %22 = vector.shape_cast %19 : vector<16x32xbf16> to vector<1x16x32xbf16>
      tpu.vector_store %arg7[%c0_17, %c0_18, %c0_19], %22 {strides = array<i32>} : memref<1x16x32xbf16, #tpu.memory_space<vmem>>, vector<1x16x32xbf16>,
    } else {
    }
    return
  }
  func.func @transform_0(%arg0: i32, %arg1: i32, %arg2: i32, %arg3: i32) -> (i32, i32, i32) {
    %c0_i32 = arith.constant 0 : i32
    return %arg0, %arg1, %arg3 : i32, i32, i32
  }
  func.func @transform_1(%arg0: i32, %arg1: i32, %arg2: i32, %arg3: i32) -> (i32, i32, i32) {
    %c0_i32 = arith.constant 0 : i32
    return %arg0, %arg3, %arg2 : i32, i32, i32
  }
  func.func @transform_2(%arg0: i32, %arg1: i32, %arg2: i32, %arg3: i32) -> (i32, i32, i32) {
    %c0_i32 = arith.constant 0 : i32
    %c0_i32_0 = arith.constant 0 : i32
    return %arg0, %c0_i32, %arg2 : i32, i32, i32
  }
  func.func @transform_3(%arg0: i32, %arg1: i32, %arg2: i32, %arg3: i32) -> (i32, i32, i32) {
    %c0_i32 = arith.constant 0 : i32
    return %arg0, %arg1, %arg2 : i32, i32, i32
  }
}

module attributes {stable_mosaic.version = 11 : i64} {
  func.func @attn_kernel(%arg0: i32, %arg1: i32, %arg2: i32, %arg3: memref<1x1x8x8xbf16, #tpu.memory_space<vmem>>, %arg4: memref<1x1x8x8xbf16, #tpu.memory_space<vmem>>, %arg5: memref<1x1x8x8xbf16, #tpu.memory_space<vmem>>, %arg6: memref<1x8x32xbf16, #tpu.memory_space<vmem>>, %arg7: memref<1x32xf32, #tpu.memory_space<vmem>>, %arg8: memref<1x8x32xf32, #tpu.memory_space<vmem>>, %arg9: memref<1x1x8x8xf32, #tpu.memory_space<vmem>>, %arg10: memref<8x32xf32, #tpu.memory_space<vmem>>) attributes {dimension_semantics = [#tpu.dimension_semantics<parallel>, #tpu.dimension_semantics<parallel>, #tpu.dimension_semantics<arbitrary>], iteration_bounds = array<i64: 2, 1, 4>, scalar_prefetch = 0 : i64, scratch_operands = 1 : i64, tpu.core_type = #tpu.core_type<tc>, window_params = [{transform_indices = @transform_0, window_bounds = array<i64: 1, 1, 8, 8>}, {transform_indices = @transform_1, window_bounds = array<i64: 1, 1, 8, 8>}, {transform_indices = @transform_2, window_bounds = array<i64: 1, 1, 8, 8>}, {transform_indices = @transform_3, window_bounds = array<i64: 1, 8, 32>}, {pipeline_mode = #tpu.pipeline_mode<synchronous>, transform_indices = @transform_4, window_bounds = array<i64: 1, 32>}, {transform_indices = @transform_5, window_bounds = array<i64: 1, 8, 32>}, {transform_indices = @transform_6, window_bounds = array<i64: 1, 1, 8, 8>}]} {
    %c0_i32 = arith.constant 0 : i32
    %0 = arith.cmpi eq, %arg2, %c0_i32 : i32
    %1 = arith.extui %0 : i1 to i32
    %c0_i32_0 = arith.constant 0 : i32
    %2 = arith.cmpi ne, %1, %c0_i32_0 : i32
    scf.if %2 {
      %cst_29 = arith.constant 0.000000e+00 : f32
      %38 = vector.broadcast %cst_29 : f32 to vector<8x32xf32>
      %c0_30 = arith.constant 0 : index
      %c0_31 = arith.constant 0 : index
      %39 = vector.load %arg10[%c0_30, %c0_31] : memref<8x32xf32, #tpu.memory_space<vmem>>, vector<8x32xf32>
      tpu.vector_store %arg10[%c0_30, %c0_31], %38 {strides = array<i32>} : memref<8x32xf32, #tpu.memory_space<vmem>>, vector<8x32xf32>,
    } else {
    }
    %c0 = arith.constant 0 : index
    %c0_1 = arith.constant 0 : index
    %c0_2 = arith.constant 0 : index
    %c0_3 = arith.constant 0 : index
    %3 = vector.load %arg3[%c0, %c0_1, %c0_2, %c0_3] : memref<1x1x8x8xbf16, #tpu.memory_space<vmem>>, vector<1x1x8x8xbf16>
    %4 = vector.shape_cast %3 : vector<1x1x8x8xbf16> to vector<8x8xbf16>
    %c0_4 = arith.constant 0 : index
    %c0_5 = arith.constant 0 : index
    %c0_6 = arith.constant 0 : index
    %c0_7 = arith.constant 0 : index
    %5 = vector.load %arg4[%c0_4, %c0_5, %c0_6, %c0_7] : memref<1x1x8x8xbf16, #tpu.memory_space<vmem>>, vector<1x1x8x8xbf16>
    %6 = vector.shape_cast %5 : vector<1x1x8x8xbf16> to vector<8x8xbf16>
    %c0_8 = arith.constant 0 : index
    %c0_9 = arith.constant 0 : index
    %c0_10 = arith.constant 0 : index
    %c0_11 = arith.constant 0 : index
    %7 = vector.load %arg5[%c0_8, %c0_9, %c0_10, %c0_11] : memref<1x1x8x8xbf16, #tpu.memory_space<vmem>>, vector<1x1x8x8xbf16>
    %8 = vector.shape_cast %7 : vector<1x1x8x8xbf16> to vector<8x8xbf16>
    %cst = arith.constant dense<0.000000e+00> : vector<8x8xf32>
    %9 = tpu.matmul %4, %6, %cst {dimension_numbers = #tpu.dot_dimension_numbers<[1], [1], [0], [0], [0, 0, 1, 0], [], []>} : vector<8x8xbf16>, vector<8x8xbf16>, vector<8x8xf32> -> vector<8x8xf32>
    %cst_12 = arith.constant dense<0xFF800000> : vector<8xf32>
    %10 = vector.multi_reduction <maximumf>, %9, %cst_12 [1] : vector<8x8xf32> to vector<8xf32>
    %11 = vector.shape_cast %10 : vector<8xf32> to vector<8x1xf32>
    %12 = vector.broadcast %11 : vector<8x1xf32> to vector<8x8xf32>
    %13 = arith.subf %9, %12 : vector<8x8xf32>
    %14 = math.exp %13 : vector<8x8xf32>
    %cst_13 = arith.constant dense<0.000000e+00> : vector<8xf32>
    %15 = vector.multi_reduction <add>, %14, %cst_13 [1] : vector<8x8xf32> to vector<8xf32>
    %16 = vector.shape_cast %15 : vector<8xf32> to vector<8x1xf32>
    %cst_14 = arith.constant 1.000000e+00 : f32
    %17 = vector.broadcast %cst_14 : f32 to vector<8x1xf32>
    %18 = arith.divf %17, %16 : vector<8x1xf32>
    %19 = vector.broadcast %18 : vector<8x1xf32> to vector<8x8xf32>
    %20 = arith.mulf %14, %19 : vector<8x8xf32>
    %c0_15 = arith.constant 0 : index
    %c0_16 = arith.constant 0 : index
    %c0_17 = arith.constant 0 : index
    %c0_18 = arith.constant 0 : index
    %21 = vector.load %arg9[%c0_15, %c0_16, %c0_17, %c0_18] : memref<1x1x8x8xf32, #tpu.memory_space<vmem>>, vector<1x1x8x8xf32>
    %22 = vector.shape_cast %21 : vector<1x1x8x8xf32> to vector<8x8xf32>
    %23 = vector.shape_cast %20 : vector<8x8xf32> to vector<1x1x8x8xf32>
    tpu.vector_store %arg9[%c0_15, %c0_16, %c0_17, %c0_18], %23 {strides = array<i32>} : memref<1x1x8x8xf32, #tpu.memory_space<vmem>>, vector<1x1x8x8xf32>,
    %24 = arith.truncf %14 : vector<8x8xf32> to vector<8x8xbf16>
    %cst_19 = arith.constant dense<0.000000e+00> : vector<8x8xf32>
    %25 = tpu.matmul %24, %8, %cst_19 {dimension_numbers = #tpu.dot_dimension_numbers<[1], [0], [0], [1], [0, 0, 1, 1], [], []>} : vector<8x8xbf16>, vector<8x8xbf16>, vector<8x8xf32> -> vector<8x8xf32>
    %26 = vector.broadcast %18 : vector<8x1xf32> to vector<8x8xf32>
    %27 = arith.mulf %25, %26 : vector<8x8xf32>
    %c0_20 = arith.constant 0 : index
    %c0_21 = arith.constant 0 : index
    %28 = vector.load %arg10[%c0_20, %c0_21] : memref<8x32xf32, #tpu.memory_space<vmem>>, vector<8x32xf32>
    %29 = arith.truncf %27 : vector<8x8xf32> to vector<8x8xbf16>
    %c0_22 = arith.constant 0 : index
    %c0_23 = arith.constant 0 : index
    %c0_24 = arith.constant 0 : index
    %30 = vector.load %arg6[%c0_22, %c0_23, %c0_24] : memref<1x8x32xbf16, #tpu.memory_space<vmem>>, vector<1x8x32xbf16>
    %31 = vector.shape_cast %30 : vector<1x8x32xbf16> to vector<8x32xbf16>
    %cst_25 = arith.constant dense<0.000000e+00> : vector<8x32xf32>
    %32 = tpu.matmul %29, %31, %cst_25 {dimension_numbers = #tpu.dot_dimension_numbers<[1], [0], [0], [1], [0, 0, 1, 1], [], []>} : vector<8x8xbf16>, vector<8x32xbf16>, vector<8x32xf32> -> vector<8x32xf32>
    %33 = arith.addf %28, %32 : vector<8x32xf32>
    %c0_26 = arith.constant 0 : index
    %c0_27 = arith.constant 0 : index
    %34 = vector.load %arg10[%c0_26, %c0_27] : memref<8x32xf32, #tpu.memory_space<vmem>>, vector<8x32xf32>
    tpu.vector_store %arg10[%c0_26, %c0_27], %33 {strides = array<i32>} : memref<8x32xf32, #tpu.memory_space<vmem>>, vector<8x32xf32>,
    %c3_i32 = arith.constant 3 : i32
    %35 = arith.cmpi eq, %arg2, %c3_i32 : i32
    %36 = arith.extui %35 : i1 to i32
    %c0_i32_28 = arith.constant 0 : i32
    %37 = arith.cmpi ne, %36, %c0_i32_28 : i32
    scf.if %37 {
      %c0_29 = arith.constant 0 : index
      %c0_30 = arith.constant 0 : index
      %38 = vector.load %arg10[%c0_29, %c0_30] : memref<8x32xf32, #tpu.memory_space<vmem>>, vector<8x32xf32>
      %c0_31 = arith.constant 0 : index
      %c0_32 = arith.constant 0 : index
      %39 = vector.load %arg7[%c0_31, %c0_32] : memref<1x32xf32, #tpu.memory_space<vmem>>, vector<1x32xf32>
      %40 = vector.shape_cast %39 : vector<1x32xf32> to vector<32xf32>
      %41 = vector.shape_cast %40 : vector<32xf32> to vector<1x32xf32>
      %42 = vector.broadcast %41 : vector<1x32xf32> to vector<8x32xf32>
      %43 = arith.addf %38, %42 : vector<8x32xf32>
      %c0_33 = arith.constant 0 : index
      %c0_34 = arith.constant 0 : index
      %c0_35 = arith.constant 0 : index
      %44 = vector.load %arg8[%c0_33, %c0_34, %c0_35] : memref<1x8x32xf32, #tpu.memory_space<vmem>>, vector<1x8x32xf32>
      %45 = vector.shape_cast %44 : vector<1x8x32xf32> to vector<8x32xf32>
      %46 = vector.shape_cast %43 : vector<8x32xf32> to vector<1x8x32xf32>
      tpu.vector_store %arg8[%c0_33, %c0_34, %c0_35], %46 {strides = array<i32>} : memref<1x8x32xf32, #tpu.memory_space<vmem>>, vector<1x8x32xf32>,
    } else {
    }
    return
  }
  func.func @transform_0(%arg0: i32, %arg1: i32, %arg2: i32) -> (i32, i32, i32, i32) {
    %c0_i32 = arith.constant 0 : i32
    %c0_i32_0 = arith.constant 0 : i32
    return %arg0, %arg2, %arg1, %c0_i32 : i32, i32, i32, i32
  }
  func.func @transform_1(%arg0: i32, %arg1: i32, %arg2: i32) -> (i32, i32, i32, i32) {
    %c0_i32 = arith.constant 0 : i32
    %c0_i32_0 = arith.constant 0 : i32
    %c0_i32_1 = arith.constant 0 : i32
    return %arg0, %arg2, %c0_i32, %c0_i32_0 : i32, i32, i32, i32
  }
  func.func @transform_2(%arg0: i32, %arg1: i32, %arg2: i32) -> (i32, i32, i32, i32) {
    %c0_i32 = arith.constant 0 : i32
    %c0_i32_0 = arith.constant 0 : i32
    %c0_i32_1 = arith.constant 0 : i32
    return %arg0, %arg2, %c0_i32, %c0_i32_0 : i32, i32, i32, i32
  }
  func.func @transform_3(%arg0: i32, %arg1: i32, %arg2: i32) -> (i32, i32, i32) {
    %c0_i32 = arith.constant 0 : i32
    %c0_i32_0 = arith.constant 0 : i32
    %c0_i32_1 = arith.constant 0 : i32
    return %arg2, %c0_i32, %c0_i32_0 : i32, i32, i32
  }
  func.func @transform_4(%arg0: i32, %arg1: i32, %arg2: i32) -> (i32, i32) {
    %c0_i32 = arith.constant 0 : i32
    %c0_i32_0 = arith.constant 0 : i32
    %c0_i32_1 = arith.constant 0 : i32
    return %c0_i32, %c0_i32_0 : i32, i32
  }
  func.func @transform_5(%arg0: i32, %arg1: i32, %arg2: i32) -> (i32, i32, i32) {
    %c0_i32 = arith.constant 0 : i32
    %c0_i32_0 = arith.constant 0 : i32
    return %arg0, %arg1, %c0_i32 : i32, i32, i32
  }
  func.func @transform_6(%arg0: i32, %arg1: i32, %arg2: i32) -> (i32, i32, i32, i32) {
    %c0_i32 = arith.constant 0 : i32
    %c0_i32_0 = arith.constant 0 : i32
    return %arg0, %arg2, %arg1, %c0_i32 : i32, i32, i32, i32
  }
}

</mosaic_0001>

<llo_original>
// kernel: multi_head_attention.3
$region0: #{multi_head_attention.3}
  #allocation0 [shape = 'u32[]', space=smem, size = 0x4, offset = 0x4, fixed_abs, tag = 'smem constant byte address 0x4 - core index']
  #allocation1 [shape = 'u32[144,128]{1,0:T(1,128)}', space=vmem, size = 0x12000, scoped, tag = 'internal scratch']
  #allocation2 [shape = 'f32[8,32]{1,0:T(8,128)}', space=vmem, size = 0x1000, scoped, tag = 'scratch operand']
  %s0 = inlined_call_operand.vmem [shape: bf16[2,4,8,8], index: 0, kind: input, shape index: {}]
  %s1 = inlined_call_operand.vmem [shape: bf16[2,4,8,8], index: 1, kind: input, shape index: {}]
  %s2 = inlined_call_operand.vmem [shape: bf16[2,4,8,8], index: 2, kind: input, shape index: {}]
  %s3 = inlined_call_operand.vmem [shape: bf16[4,8,32], index: 3, kind: input, shape index: {}]
  %s4 = inlined_call_operand.vmem [shape: f32[1,32], index: 4, kind: input, shape index: {}]
  %s5 = inlined_call_operand.vmem [shape: f32[2,8,32], index: 5, kind: output, shape index: {0}]
  %s6 = inlined_call_operand.hbm [shape: f32[2,4,8,8], index: 6, kind: output, shape index: {1}]
  %7 = xla_tuple %s5, %s6
  %s8 = sld [smem:[#allocation0]]
  $region69: #{multi_head_attention.3} parent=0
    _
  %s10 = ssub.s32 1, %s8
  %s11 = scalar_select 0, %s10, %s8
  $region1: #{multi_head_attention.3} parent=0
    #allocation3 [shape = 'u8[8192]{0}', space=vmem, size = 0x2000, scoped, tag = 'output window, operand 1']
    #allocation4 [shape = 's32[2]{0}', space=sflag, size = 0x8, scoped, tag = 'scoped memory for multi_head_attention.3']
    %12 = vsyncpa [#allocation4], 0
    %s13 = scalar_lea.sflag [#allocation4], 1
    %14 = vsyncpa %s13, 0
    loop: start=0, step=1, limit=10
    $region2: #{multi_head_attention.3} parent=1 // loop_pre_header
      _
    $region3: #{multi_head_attention.3} parent=1 // loop_header
      %s16 = sphi 0, %s20
      %p17 = scmp.ge.s32.totalorder %s16, 10
      %s23 = sphi 0, %s42
      %s24 = sphi 0, %s38
      %s25 = sphi 0, %s34
      %s26 = sphi 0, %s23
      %s27 = sphi 0, %s24
      %s28 = sphi 0, %s25
      %s29 = sphi 0, %s26
      %s30 = sphi 0, %s27
      %s31 = sphi 0, %s28
      %s49 = sphi 0, %s51
      %s52 = sphi 0, %s49
      %s53 = sphi 0, %s52
      %s69 = sphi 0, %s53
      %s77 = sphi 0, %s79
      %s80 = sphi 0, %s77
      %s81 = sphi 0, %s80
      %s97 = sphi 0, %s81
      %s105 = sphi 0, %s107
      %s108 = sphi 0, %s105
      %s109 = sphi 0, %s108
      %s125 = sphi 0, %s109
      %s131 = sphi 0, %s133
      %s134 = sphi 0, %s131
      %s135 = sphi 0, %s134
      %s151 = sphi 0, %s135
      %s155 = sphi 0, %s155
      %s157 = sphi 0, %s155
      %s158 = sphi 0, %s157
      %s172 = sphi 0, %s158
      %s180 = sphi 0, %s182
      %s183 = sphi 0, %s180
      %s184 = sphi 0, %s183
      %s200 = sphi 0, %s184
      %s210 = sphi 0, %s212
      %s213 = sphi 0, %s210
      %s214 = sphi 0, %s213
      %s230 = sphi 0, %s214
    $region4: #{multi_head_attention.3} parent=1 // loop_header_branch
      %19 = sbr.rel (%p17) target = $region8
    $region5: #{multi_head_attention.3} parent=1 // loop_body
      %s21 = ssub.s32 %s16, 1
      %s22 = ssub.s32 %s16, 2
      %s32 = sadd.s32 1, %s25
      %p33 = scmp.ge.s32.totalorder %s32, 4
      %s34 = scalar_select %p33, 0, %s32
      %s35 = sadd.s32 1, %s24
      %s36 = scalar_select %p33, %s35, %s24
      %p37 = scmp.ge.s32.totalorder %s36, 1
      %s38 = scalar_select %p37, 0, %s36
      %s39 = sadd.s32 1, %s23
      %s40 = scalar_select %p37, %s39, %s23
      %p41 = scmp.ge.s32.totalorder %s40, 2
      %s42 = scalar_select %p41, 0, %s40
      %s43 = ssub.s32 %s23, %s42
      %s44 = ssub.s32 %s25, %s34
      %s45 = sor.u32 %s43, %s44
      %s46 = ssub.s32 %s24, %s38
      %s47 = sor.u32 %s45, %s46
      %p48 = scmp.eq.s32.totalorder %s47, 0
      %s50 = sadd.s32 %s49, 1
      %s51 = scalar_select %p48, %s49, %s50
      %p54 = pneg %p48
      %p55 = scmp.eq.s32.totalorder %s16, 7
      %p56 = por %p54, %p55
      %p57 = scmp.ne.s32.totalorder %s49, %s52
      %p58 = scmp.eq.s32.totalorder %s16, 0
      %p59 = por %p57, %p58
      %p60 = scmp.ne.s32.totalorder %s49, %s52
      %p61 = scmp.eq.s32.totalorder %s21, 7
      %p62 = por %p60, %p61
      %p63 = scmp.ne.s32.totalorder %s52, %s53
      %p64 = scmp.eq.s32.totalorder %s21, 0
      %p65 = por %p63, %p64
      %p66 = scmp.ne.s32.totalorder %s52, %s53
      %p67 = scmp.eq.s32.totalorder %s22, 7
      %p68 = por %p66, %p67
      %p70 = scmp.ne.s32.totalorder %s53, %s69
      %p71 = scmp.eq.s32.totalorder %s22, 0
      %p72 = por %p70, %p71
      %s73 = ssub.s32 %s23, %s42
      %s74 = ssub.s32 %s25, %s34
      %s75 = sor.u32 %s73, %s74
      %p76 = scmp.eq.s32.totalorder %s75, 0
      %s78 = sadd.s32 %s77, 1
      %s79 = scalar_select %p76, %s77, %s78
      %p82 = pneg %p76
      %p83 = scmp.eq.s32.totalorder %s16, 7
      %p84 = por %p82, %p83
      %p85 = scmp.ne.s32.totalorder %s77, %s80
      %p86 = scmp.eq.s32.totalorder %s16, 0
      %p87 = por %p85, %p86
      %p88 = scmp.ne.s32.totalorder %s77, %s80
      %p89 = scmp.eq.s32.totalorder %s21, 7
      %p90 = por %p88, %p89
      %p91 = scmp.ne.s32.totalorder %s80, %s81
      %p92 = scmp.eq.s32.totalorder %s21, 0
      %p93 = por %p91, %p92
      %p94 = scmp.ne.s32.totalorder %s80, %s81
      %p95 = scmp.eq.s32.totalorder %s22, 7
      %p96 = por %p94, %p95
      %p98 = scmp.ne.s32.totalorder %s81, %s97
      %p99 = scmp.eq.s32.totalorder %s22, 0
      %p100 = por %p98, %p99
      %s101 = ssub.s32 %s23, %s42
      %s102 = ssub.s32 %s25, %s34
      %s103 = sor.u32 %s101, %s102
      %p104 = scmp.eq.s32.totalorder %s103, 0
      %s106 = sadd.s32 %s105, 1
      %s107 = scalar_select %p104, %s105, %s106
      %p110 = pneg %p104
      %p111 = scmp.eq.s32.totalorder %s16, 7
      %p112 = por %p110, %p111
      %p113 = scmp.ne.s32.totalorder %s105, %s108
      %p114 = scmp.eq.s32.totalorder %s16, 0
      %p115 = por %p113, %p114
      %p116 = scmp.ne.s32.totalorder %s105, %s108
      %p117 = scmp.eq.s32.totalorder %s21, 7
      %p118 = por %p116, %p117
      %p119 = scmp.ne.s32.totalorder %s108, %s109
      %p120 = scmp.eq.s32.totalorder %s21, 0
      %p121 = por %p119, %p120
      %p122 = scmp.ne.s32.totalorder %s108, %s109
      %p123 = scmp.eq.s32.totalorder %s22, 7
      %p124 = por %p122, %p123
      %p126 = scmp.ne.s32.totalorder %s109, %s125
      %p127 = scmp.eq.s32.totalorder %s22, 0
      %p128 = por %p126, %p127
      %s129 = ssub.s32 %s25, %s34
      %p130 = scmp.eq.s32.totalorder %s129, 0
      %s132 = sadd.s32 %s131, 1
      %s133 = scalar_select %p130, %s131, %s132
      %p136 = pneg %p130
      %p137 = scmp.eq.s32.totalorder %s16, 7
      %p138 = por %p136, %p137
      %p139 = scmp.ne.s32.totalorder %s131, %s134
      %p140 = scmp.eq.s32.totalorder %s16, 0
      %p141 = por %p139, %p140
      %p142 = scmp.ne.s32.totalorder %s131, %s134
      %p143 = scmp.eq.s32.totalorder %s21, 7
      %p144 = por %p142, %p143
      %p145 = scmp.ne.s32.totalorder %s134, %s135
      %p146 = scmp.eq.s32.totalorder %s21, 0
      %p147 = por %p145, %p146
      %p148 = scmp.ne.s32.totalorder %s134, %s135
      %p149 = scmp.eq.s32.totalorder %s22, 7
      %p150 = por %p148, %p149
      %p152 = scmp.ne.s32.totalorder %s135, %s151
      %p153 = scmp.eq.s32.totalorder %s22, 0
      %p154 = por %p152, %p153
      %s156 = sadd.s32 %s155, 1
      %p159 = scmp.eq.s32.totalorder %s16, 7
      %p160 = scmp.ne.s32.totalorder %s155, %s157
      %p161 = scmp.eq.s32.totalorder %s16, 0
      %p162 = por %p160, %p161
      %p163 = scmp.ne.s32.totalorder %s155, %s157
      %p164 = scmp.eq.s32.totalorder %s21, 7
      %p165 = por %p163, %p164
      %p166 = scmp.ne.s32.totalorder %s157, %s158
      %p167 = scmp.eq.s32.totalorder %s21, 0
      %p168 = por %p166, %p167
      %p169 = scmp.ne.s32.totalorder %s157, %s158
      %p170 = scmp.eq.s32.totalorder %s22, 7
      %p171 = por %p169, %p170
      %p173 = scmp.ne.s32.totalorder %s158, %s172
      %p174 = scmp.eq.s32.totalorder %s22, 0
      %p175 = por %p173, %p174
      %s176 = ssub.s32 %s23, %s42
      %s177 = ssub.s32 %s24, %s38
      %s178 = sor.u32 %s176, %s177
      %p179 = scmp.eq.s32.totalorder %s178, 0
      %s181 = sadd.s32 %s180, 1
      %s182 = scalar_select %p179, %s180, %s181
      %p185 = pneg %p179
      %p186 = scmp.eq.s32.totalorder %s16, 7
      %p187 = por %p185, %p186
      %p188 = scmp.ne.s32.totalorder %s180, %s183
      %p189 = scmp.eq.s32.totalorder %s16, 0
      %p190 = por %p188, %p189
      %p191 = scmp.ne.s32.totalorder %s180, %s183
      %p192 = scmp.eq.s32.totalorder %s21, 7
      %p193 = por %p191, %p192
      %p194 = scmp.ne.s32.totalorder %s183, %s184
      %p195 = scmp.eq.s32.totalorder %s21, 0
      %p196 = por %p194, %p195
      %p197 = scmp.ne.s32.totalorder %s183, %s184
      %p198 = scmp.eq.s32.totalorder %s22, 7
      %p199 = por %p197, %p198
      %p201 = scmp.ne.s32.totalorder %s184, %s200
      %p202 = scmp.eq.s32.totalorder %s22, 0
      %p203 = por %p201, %p202
      %s204 = ssub.s32 %s23, %s42
      %s205 = ssub.s32 %s25, %s34
      %s206 = sor.u32 %s204, %s205
      %s207 = ssub.s32 %s24, %s38
      %s208 = sor.u32 %s206, %s207
      %p209 = scmp.eq.s32.totalorder %s208, 0
      %s211 = sadd.s32 %s210, 1
      %s212 = scalar_select %p209, %s210, %s211
      %p215 = pneg %p209
      %p216 = scmp.eq.s32.totalorder %s16, 7
      %p217 = por %p215, %p216
      %p218 = scmp.ne.s32.totalorder %s210, %s213
      %p219 = scmp.eq.s32.totalorder %s16, 0
      %p220 = por %p218, %p219
      %p221 = scmp.ne.s32.totalorder %s210, %s213
      %p222 = scmp.eq.s32.totalorder %s21, 7
      %p223 = por %p221, %p222
      %p224 = scmp.ne.s32.totalorder %s213, %s214
      %p225 = scmp.eq.s32.totalorder %s21, 0
      %p226 = por %p224, %p225
      %p227 = scmp.ne.s32.totalorder %s213, %s214
      %p228 = scmp.eq.s32.totalorder %s22, 7
      %p229 = por %p227, %p228
      %p231 = scmp.ne.s32.totalorder %s214, %s230
      %p232 = scmp.eq.s32.totalorder %s22, 0
      %p233 = por %p231, %p232
      %p234 = scmp.le.s32.totalorder 1, %s16
      %p235 = scmp.lt.s32.totalorder %s16, 9
      %p236 = pnand %p234, %p235
      %p237 = pneg %p236
      // Predicated region
      $region9: #{multi_head_attention.3} parent=5 // pred_check
        _
      $region10: #{multi_head_attention.3} parent=5 // pred_check_branch
        %239 = sbr.rel (%p236) target = $region12
      $region11: #{multi_head_attention.3} parent=5 // pred_region
        %s240 = ssub.s32 %s16, 1
        // Predicated region
        $region13: #{multi_head_attention.3} parent=11 // pred_check
          %p241 = pneg %p168
        $region14: #{multi_head_attention.3} parent=11 // pred_check_branch
          %243 = sbr.rel (%p241) target = $region16
        $region15: #{multi_head_attention.3} parent=11 // pred_region
          _
        $region16: #{multi_head_attention.3} parent=11 // pred_fallthru
          _
      $region12: #{multi_head_attention.3} parent=5 // pred_fallthru
        _
      %p244 = scmp.lt.s32.totalorder %s16, 8
      // Predicated region
      $region17: #{multi_head_attention.3} parent=5 // pred_check
        %p245 = pneg %p244
      $region18: #{multi_head_attention.3} parent=5 // pred_check_branch
        %247 = sbr.rel (%p245) target = $region20
      $region19: #{multi_head_attention.3} parent=5 // pred_region
        // Predicated region
        $region21: #{multi_head_attention.3} parent=19 // pred_check
          %p248 = pneg %p59
        $region22: #{multi_head_attention.3} parent=19 // pred_check_branch
          %250 = sbr.rel (%p248) target = $region24
        $region23: #{multi_head_attention.3} parent=19 // pred_region
          %p251 = scmp.lt.s32.totalorder %s23, 1
          %s252 = scalar_select %p251, %s23, 1
          %p253 = scmp.lt.s32.totalorder %s25, 3
          %s254 = scalar_select %p253, %s25, 3
          %p255 = scmp.lt.s32.totalorder %s24, 0
          %s256 = scalar_select %p255, %s24, 0
          %s257 = sadd.s32 %s256, %s254
          %s258 = smul.addr %s252, 4
          %s259 = sadd.s32 %s257, %s258
          %s260 = smul.addr %s259, 4
          %s261 = scalar_lea.vmem %s0, %s260
        $region24: #{multi_head_attention.3} parent=19 // pred_fallthru
          _
        // Predicated region
        $region25: #{multi_head_attention.3} parent=19 // pred_check
          %p262 = pneg %p87
        $region26: #{multi_head_attention.3} parent=19 // pred_check_branch
          %264 = sbr.rel (%p262) target = $region28
        $region27: #{multi_head_attention.3} parent=19 // pred_region
          %p265 = scmp.lt.s32.totalorder %s23, 1
          %s266 = scalar_select %p265, %s23, 1
          %p267 = scmp.lt.s32.totalorder %s25, 3
          %s268 = scalar_select %p267, %s25, 3
          %s269 = smul.addr %s266, 4
          %s270 = sadd.s32 %s268, %s269
          %s271 = smul.addr %s270, 4
          %s272 = scalar_lea.vmem %s1, %s271
        $region28: #{multi_head_attention.3} parent=19 // pred_fallthru
          _
        // Predicated region
        $region29: #{multi_head_attention.3} parent=19 // pred_check
          %p273 = pneg %p115
        $region30: #{multi_head_attention.3} parent=19 // pred_check_branch
          %275 = sbr.rel (%p273) target = $region32
        $region31: #{multi_head_attention.3} parent=19 // pred_region
          %p276 = scmp.lt.s32.totalorder %s23, 1
          %s277 = scalar_select %p276, %s23, 1
          %p278 = scmp.lt.s32.totalorder %s25, 3
          %s279 = scalar_select %p278, %s25, 3
          %s280 = smul.addr %s277, 4
          %s281 = sadd.s32 %s279, %s280
          %s282 = smul.addr %s281, 4
          %s283 = scalar_lea.vmem %s2, %s282
        $region32: #{multi_head_attention.3} parent=19 // pred_fallthru
          _
        // Predicated region
        $region33: #{multi_head_attention.3} parent=19 // pred_check
          %p284 = pneg %p141
        $region34: #{multi_head_attention.3} parent=19 // pred_check_branch
          %286 = sbr.rel (%p284) target = $region36
        $region35: #{multi_head_attention.3} parent=19 // pred_region
          %p287 = scmp.lt.s32.totalorder %s25, 3
          %s288 = scalar_select %p287, %s25, 3
          %s289 = smul.addr %s288, 4
          %s290 = scalar_lea.vmem %s3, %s289
        $region36: #{multi_head_attention.3} parent=19 // pred_fallthru
          _
      $region20: #{multi_head_attention.3} parent=5 // pred_fallthru
        _
      %p291 = scmp.le.s32.totalorder 1, %s16
      %p292 = scmp.lt.s32.totalorder %s16, 9
      %p293 = pnand %p291, %p292
      %p294 = pneg %p293
      // Predicated region
      $region37: #{multi_head_attention.3} parent=5 // pred_check
        _
      $region38: #{multi_head_attention.3} parent=5 // pred_check_branch
        %296 = sbr.rel (%p293) target = $region40
      $region39: #{multi_head_attention.3} parent=5 // pred_region
        %s297 = ssub.s32 %s16, 1
        %p298 = scmp.lt.s32.totalorder %s26, 1
        %s299 = scalar_select %p298, %s26, 1
        %p300 = scmp.lt.s32.totalorder %s28, 3
        %s301 = scalar_select %p300, %s28, 3
        %p302 = scmp.lt.s32.totalorder %s27, 0
        %s303 = scalar_select %p302, %s27, 0
        %s304 = sadd.s32 %s303, %s301
        %s305 = smul.addr %s299, 4
        %s306 = sadd.s32 %s304, %s305
        %s307 = smul.addr %s306, 4
        %s308 = scalar_lea.vmem %s0, %s307
        %p309 = pneg %p65
        %p310 = pneg %p62
        %p311 = scmp.lt.s32.totalorder %s26, 1
        %s312 = scalar_select %p311, %s26, 1
        %p313 = scmp.lt.s32.totalorder %s28, 3
        %s314 = scalar_select %p313, %s28, 3
        %s315 = smul.addr %s312, 4
        %s316 = sadd.s32 %s314, %s315
        %s317 = smul.addr %s316, 4
        %s318 = scalar_lea.vmem %s1, %s317
        %p319 = pneg %p93
        %p320 = pneg %p90
        %p321 = scmp.lt.s32.totalorder %s26, 1
        %s322 = scalar_select %p321, %s26, 1
        %p323 = scmp.lt.s32.totalorder %s28, 3
        %s324 = scalar_select %p323, %s28, 3
        %s325 = smul.addr %s322, 4
        %s326 = sadd.s32 %s324, %s325
        %s327 = smul.addr %s326, 4
        %s328 = scalar_lea.vmem %s2, %s327
        %p329 = pneg %p121
        %p330 = pneg %p118
        %p331 = scmp.lt.s32.totalorder %s28, 3
        %s332 = scalar_select %p331, %s28, 3
        %s333 = smul.addr %s332, 4
        %s334 = scalar_lea.vmem %s3, %s333
        %p335 = pneg %p147
        %p336 = pneg %p144
        %p337 = pneg %p168
        %p338 = pneg %p165
        %p339 = pneg %p196
        %p340 = pneg %p193
        %p341 = scmp.lt.s32.totalorder %s26, 1
        %s342 = scalar_select %p341, %s26, 1
        %p343 = scmp.lt.s32.totalorder %s27, 0
        %s344 = scalar_select %p343, %s27, 0
        %s345 = sadd.s32 %s344, %s342
        %s346 = smul.addr %s345, 8
        %s347 = scalar_lea.vmem %s5, %s346
        %p348 = pneg %p226
        %p349 = pneg %p223
        %s350 = sand.u32 %s213, 1
        %s351 = scalar_lea.sflag [#allocation4], %s350
        %s352 = sand.u32 %s213, 1
        %s353 = smul.addr %s352, 8
        %s354 = scalar_lea.vmem [#allocation3], %s353
        %p355 = scmp.lt.s32.totalorder %s26, 1
        %s356 = scalar_select %p355, %s26, 1
        %p357 = scmp.lt.s32.totalorder %s28, 3
        %s358 = scalar_select %p357, %s28, 3
        %p359 = scmp.lt.s32.totalorder %s27, 0
        %s360 = scalar_select %p359, %s27, 0
        %s361 = sadd.s32 %s360, %s358
        %s362 = smul.addr %s356, 4
        %s363 = sadd.s32 %s361, %s362
        %s364 = smul.addr %s363, 4
        %s365 = scalar_lea.vmem %s0, %s364
        %p366 = scmp.lt.s32.totalorder %s26, 1
        %s367 = scalar_select %p366, %s26, 1
        %p368 = scmp.lt.s32.totalorder %s28, 3
        %s369 = scalar_select %p368, %s28, 3
        %s370 = smul.addr %s367, 4
        %s371 = sadd.s32 %s369, %s370
        %s372 = smul.addr %s371, 4
        %s373 = scalar_lea.vmem %s1, %s372
        %p374 = scmp.lt.s32.totalorder %s26, 1
        %s375 = scalar_select %p374, %s26, 1
        %p376 = scmp.lt.s32.totalorder %s28, 3
        %s377 = scalar_select %p376, %s28, 3
        %s378 = smul.addr %s375, 4
        %s379 = sadd.s32 %s377, %s378
        %s380 = smul.addr %s379, 4
        %s381 = scalar_lea.vmem %s2, %s380
        %p382 = scmp.lt.s32.totalorder %s28, 3
        %s383 = scalar_select %p382, %s28, 3
        %s384 = smul.addr %s383, 4
        %s385 = scalar_lea.vmem %s3, %s384
        %p386 = scmp.lt.s32.totalorder %s26, 1
        %s387 = scalar_select %p386, %s26, 1
        %p388 = scmp.lt.s32.totalorder %s27, 0
        %s389 = scalar_select %p388, %s27, 0
        %s390 = sadd.s32 %s389, %s387
        %s391 = smul.addr %s390, 8
        %s392 = scalar_lea.vmem %s5, %s391
        %p394 = scmp.eq.s32.totalorder %s28, 0
        // Predicated region
        $region41: #{multi_head_attention.3} parent=39 // pred_check
          %p395 = pneg %p394
        $region42: #{multi_head_attention.3} parent=39 // pred_check_branch
          %397 = sbr.rel (%p395) target = $region44
        $region43: #{multi_head_attention.3} parent=39 // pred_region
          %vm398 = vcmask 261120
          %399 = vst.msk [vmem:[#allocation2] sm:$0xff] %vm398, 0.0
        $region44: #{multi_head_attention.3} parent=39 // pred_fallthru
          _
        %v400 = vld [vmem:[%s365] sm:$0xf]
        %v401 = vld [vmem:[%s373] sm:$0xf]
        %v402 = vld [vmem:[%s381] sm:$0xf]
        %vm403 = vcmask 64512
        %v405 = vsel %vm403, %v400, 0
        %v408 = vsel %vm403, %v401, 0
        %410 = vmatprep.subr.bf16.mxu0 0
        %411 = vmatpush1.bf16.xpose.msra.mxu0 %v408
        %412 = vmatprep.subr.bf16.mxu0 0
        %413 = vmatpush1.bf16.xpose.msra.mxu0 0
        %414 = vmatprep.subr.bf16.mxu0 0
        %415 = vmatpush1.bf16.xpose.msra.mxu0 0
        %416 = vmatprep.subr.bf16.mxu0 0
        %417 = vmatpush1.bf16.xpose.msra.mxu0 0
        %418 = vmatprep.subr.bf16.mxu0 0
        %419 = vmatpush1.bf16.xpose.msra.mxu0 0
        %420 = vmatprep.subr.bf16.mxu0 0
        %421 = vmatpush1.bf16.xpose.msra.mxu0 0
        %422 = vmatprep.subr.bf16.mxu0 0
        %423 = vmatpush1.bf16.xpose.msra.mxu0 0
        %424 = vmatprep.subr.bf16.mxu0 0
        %425 = vmatpush1.bf16.xpose.msra.mxu0 0
        %426 = vmatprep.subr.bf16.mxu0 0
        %427 = vmatpush1.bf16.xpose.msra.mxu0 0
        %428 = vmatprep.subr.bf16.mxu0 0
        %429 = vmatpush1.bf16.xpose.msra.mxu0 0
        %430 = vmatprep.subr.bf16.mxu0 0
        %431 = vmatpush1.bf16.xpose.msra.mxu0 0
        %432 = vmatprep.subr.bf16.mxu0 0
        %433 = vmatpush1.bf16.xpose.msra.mxu0 0
        %434 = vmatprep.subr.bf16.mxu0 0
        %435 = vmatpush1.bf16.xpose.msra.mxu0 0
        %436 = vmatprep.subr.bf16.mxu0 0
        %437 = vmatpush1.bf16.xpose.msra.mxu0 0
        %438 = vmatprep.subr.bf16.mxu0 0
        %439 = vmatpush1.bf16.xpose.msra.mxu0 0
        %440 = vmatprep.subr.bf16.mxu0 0
        %441 = vmatpush1.bf16.xpose.msra.mxu0 0
        %442 = vmatprep.mubr.bf16.mxu0 0
        %443 = vmatmul.mubr.bf16.gmra.mrb[0].mxu0 %v405
        %v444 = vpop.f32.mrb[0].mxu0
        %v445 = vadd.f32 0.0, %v444
        %v446 = vpop.f32.mrb[0].mxu0
        %v447 = vpop.f32.mrb[0].mxu0
        %v448 = vpop.f32.mrb[0].mxu0
        %449 = vdwg.mxu0
        %v450 = vsel %vm403, %v445, -inf
        %451 = vmax.xlane.f32.xlu0 %v450
        %v452 = vpop.xlane.xlu0 %451
        %v453 = vsub.f32 %v445, %v452
        %v454 = vmul.f32 %v453, 1.442695
        %v455 = vpow.pop %v454
        %v456 = vsel %vm403, %v455, 0.0
        %457 = vadd.xlane.f32.xlu0 %v456
        %v458 = vpop.xlane.xlu0 %457
        %v459 = vrcp.pop %v458
        %v460 = vmul.f32 1.0, %v459
        %v461 = vmul.f32 %v455, %v460
        %462 = vst.msk [vmem:[%s354] sm:$0xff] %vm403, %v461
        %v463 = vpack.c.bf16 %v455, %v455
        %v465 = vsel %vm403, %v463, 0
        %vm467 = vcmask 1043456
        %v469 = vsel %vm467, %v402, 0
        %471 = vmatprep.subr.bf16.mxu0 0
        %472 = vmatpush1.bf16.msra.mxu0 %v469
        %473 = vmatprep.subr.bf16.mxu0 0
        %474 = vmatpush1.bf16.msra.mxu0 0
        %475 = vmatprep.subr.bf16.mxu0 0
        %476 = vmatpush1.bf16.msra.mxu0 0
        %477 = vmatprep.subr.bf16.mxu0 0
        %478 = vmatpush1.bf16.msra.mxu0 0
        %479 = vmatprep.subr.bf16.mxu0 0
        %480 = vmatpush1.bf16.msra.mxu0 0
        %481 = vmatprep.subr.bf16.mxu0 0
        %482 = vmatpush1.bf16.msra.mxu0 0
        %483 = vmatprep.subr.bf16.mxu0 0
        %484 = vmatpush1.bf16.msra.mxu0 0
        %485 = vmatprep.subr.bf16.mxu0 0
        %486 = vmatpush1.bf16.msra.mxu0 0
        %487 = vmatprep.subr.bf16.mxu0 0
        %488 = vmatpush1.bf16.msra.mxu0 0
        %489 = vmatprep.subr.bf16.mxu0 0
        %490 = vmatpush1.bf16.msra.mxu0 0
        %491 = vmatprep.subr.bf16.mxu0 0
        %492 = vmatpush1.bf16.msra.mxu0 0
        %493 = vmatprep.subr.bf16.mxu0 0
        %494 = vmatpush1.bf16.msra.mxu0 0
        %495 = vmatprep.subr.bf16.mxu0 0
        %496 = vmatpush1.bf16.msra.mxu0 0
        %497 = vmatprep.subr.bf16.mxu0 0
        %498 = vmatpush1.bf16.msra.mxu0 0
        %499 = vmatprep.subr.bf16.mxu0 0
        %500 = vmatpush1.bf16.msra.mxu0 0
        %501 = vmatprep.subr.bf16.mxu0 0
        %502 = vmatpush1.bf16.msra.mxu0 0
        %503 = vmatprep.mubr.bf16.mxu0 0
        %504 = vmatmul.mubr.bf16.gmra.mrb[0].mxu0 %v465
        %v505 = vpop.f32.mrb[0].mxu0
        %v506 = vadd.f32 0.0, %v505
        %v507 = vpop.f32.mrb[0].mxu0
        %v508 = vpop.f32.mrb[0].mxu0
        %v509 = vpop.f32.mrb[0].mxu0
        %510 = vdwg.mxu0
        %v511 = vmul.f32 %v506, %v460
        %v512 = vld [vmem:[#allocation2] sm:$0xff]
        %v513 = vpack.c.bf16 %v511, %v511
        %v514 = vld [vmem:[%s385] sm:$0xf]
        %v516 = vsel %vm403, %v513, 0
        %v519 = vsel %vm467, %v514, 0
        %521 = vmatprep.subr.bf16.mxu0 0
        %522 = vmatpush1.bf16.msra.mxu0 %v519
        %523 = vmatprep.subr.bf16.mxu0 0
        %524 = vmatpush1.bf16.msra.mxu0 0
        %525 = vmatprep.subr.bf16.mxu0 0
        %526 = vmatpush1.bf16.msra.mxu0 0
        %527 = vmatprep.subr.bf16.mxu0 0
        %528 = vmatpush1.bf16.msra.mxu0 0
        %529 = vmatprep.subr.bf16.mxu0 0
        %530 = vmatpush1.bf16.msra.mxu0 0
        %531 = vmatprep.subr.bf16.mxu0 0
        %532 = vmatpush1.bf16.msra.mxu0 0
        %533 = vmatprep.subr.bf16.mxu0 0
        %534 = vmatpush1.bf16.msra.mxu0 0
        %535 = vmatprep.subr.bf16.mxu0 0
        %536 = vmatpush1.bf16.msra.mxu0 0
        %537 = vmatprep.subr.bf16.mxu0 0
        %538 = vmatpush1.bf16.msra.mxu0 0
        %539 = vmatprep.subr.bf16.mxu0 0
        %540 = vmatpush1.bf16.msra.mxu0 0
        %541 = vmatprep.subr.bf16.mxu0 0
        %542 = vmatpush1.bf16.msra.mxu0 0
        %543 = vmatprep.subr.bf16.mxu0 0
        %544 = vmatpush1.bf16.msra.mxu0 0
        %545 = vmatprep.subr.bf16.mxu0 0
        %546 = vmatpush1.bf16.msra.mxu0 0
        %547 = vmatprep.subr.bf16.mxu0 0
        %548 = vmatpush1.bf16.msra.mxu0 0
        %549 = vmatprep.subr.bf16.mxu0 0
        %550 = vmatpush1.bf16.msra.mxu0 0
        %551 = vmatprep.subr.bf16.mxu0 0
        %552 = vmatpush1.bf16.msra.mxu0 0
        %553 = vmatprep.mubr.bf16.mxu0 0
        %554 = vmatmul.mubr.bf16.gmra.mrb[0].mxu0 %v516
        %v555 = vpop.f32.mrb[0].mxu0
        %v556 = vadd.f32 0.0, %v555
        %v557 = vpop.f32.mrb[0].mxu0
        %v558 = vpop.f32.mrb[0].mxu0
        %v559 = vpop.f32.mrb[0].mxu0
        %560 = vdwg.mxu0
        %v561 = vadd.f32 %v512, %v556
        %vm562 = vcmask 261120
        %563 = vst.msk [vmem:[#allocation2] sm:$0xff] %vm562, %v561
        %p564 = scmp.eq.s32.totalorder %s28, 3
        // Predicated region
        $region45: #{multi_head_attention.3} parent=39 // pred_check
          %p565 = pneg %p564
        $region46: #{multi_head_attention.3} parent=39 // pred_check_branch
          %567 = sbr.rel (%p565) target = $region48
        $region47: #{multi_head_attention.3} parent=39 // pred_region
          %v568 = vld [vmem:[#allocation2] sm:$0xff]
          %v569 = vld [vmem:[%s4] sm:$0x1]
          %v571 = vlaneseq
          %v572 = vshrl.u32 %v571, 7
          %v573 = vsub.s32 0, %v572
          %v574 = vrot.slane %v569, %v573
          %v576 = vadd.f32 %v568, %v574
          %577 = vst.msk [vmem:[%s392] sm:$0xff] %vm562, %v576
        $region48: #{multi_head_attention.3} parent=39 // pred_fallthru
          _
        %p578 = scmp.lt.s32.totalorder %s26, 1
        %s579 = scalar_select %p578, %s26, 1
        %p580 = scmp.lt.s32.totalorder %s27, 0
        %s581 = scalar_select %p580, %s27, 0
        %s582 = sadd.s32 %s581, %s579
        %s583 = smul.addr %s582, 8
        %s584 = scalar_lea.vmem %s5, %s583
        %s585 = sand.u32 %s213, 1
        %s586 = scalar_lea.sflag [#allocation4], %s585
        %s587 = sand.u32 %s213, 1
        %s588 = smul.addr %s587, 8
        %s589 = scalar_lea.vmem [#allocation3], %s588
        // Predicated region
        $region49: #{multi_head_attention.3} parent=39 // pred_check
          %p590 = pneg %p193
        $region50: #{multi_head_attention.3} parent=39 // pred_check_branch
          %592 = sbr.rel (%p590) target = $region52
        $region51: #{multi_head_attention.3} parent=39 // pred_region
          _
        $region52: #{multi_head_attention.3} parent=39 // pred_fallthru
          _
        // Predicated region
        $region53: #{multi_head_attention.3} parent=39 // pred_check
          %p593 = pneg %p223
        $region54: #{multi_head_attention.3} parent=39 // pred_check_branch
          %595 = sbr.rel (%p593) target = $region56
        $region55: #{multi_head_attention.3} parent=39 // pred_region
          %s597 = ssub.s32 128, 128
          %598 = vsyncadd %s586, %s597
          %s599 = sadd.s32 %s27, %s28
          %s600 = smul.addr %s26, 4
          %s601 = sadd.s32 %s599, %s600
          %s602 = smul.addr %s601, 128
          %s603 = scalar_lea.hbm %s6, %s602
          %s605 = sshll.u32 %s589, 4
          %s606 = int_to_ptr.vmem [resolvable:$true] %s605
          %608 = dma.vmem_to_hbm [thread:$0]  %s606, 128, %s603, %s586
        $region56: #{multi_head_attention.3} parent=39 // pred_fallthru
          _
      $region40: #{multi_head_attention.3} parent=5 // pred_fallthru
        _
      %p609 = scmp.le.s32.totalorder 2, %s16
      // Predicated region
      $region57: #{multi_head_attention.3} parent=5 // pred_check
        %p610 = pneg %p609
      $region58: #{multi_head_attention.3} parent=5 // pred_check_branch
        %612 = sbr.rel (%p610) target = $region60
      $region59: #{multi_head_attention.3} parent=5 // pred_region
        %s613 = ssub.s32 %s16, 2
        // Predicated region
        $region61: #{multi_head_attention.3} parent=59 // pred_check
          %p614 = pneg %p199
        $region62: #{multi_head_attention.3} parent=59 // pred_check_branch
          %616 = sbr.rel (%p614) target = $region64
        $region63: #{multi_head_attention.3} parent=59 // pred_region
          %p617 = scmp.lt.s32.totalorder %s29, 1
          %s618 = scalar_select %p617, %s29, 1
          %p619 = scmp.lt.s32.totalorder %s30, 0
          %s620 = scalar_select %p619, %s30, 0
          %s621 = sadd.s32 %s620, %s618
          %s622 = smul.addr %s621, 8
          %s623 = scalar_lea.vmem %s5, %s622
        $region64: #{multi_head_attention.3} parent=59 // pred_fallthru
          _
        // Predicated region
        $region65: #{multi_head_attention.3} parent=59 // pred_check
          %p624 = pneg %p229
        $region66: #{multi_head_attention.3} parent=59 // pred_check_branch
          %626 = sbr.rel (%p624) target = $region68
        $region67: #{multi_head_attention.3} parent=59 // pred_region
          %s627 = sand.u32 %s214, 1
          %s628 = scalar_lea.sflag [#allocation4], %s627
          %s629 = sand.u32 %s214, 1
          %s630 = smul.addr %s629, 8
          %s631 = scalar_lea.vmem [#allocation3], %s630
          %632 = dma.done %s628, 128
        $region68: #{multi_head_attention.3} parent=59 // pred_fallthru
          _
      $region60: #{multi_head_attention.3} parent=5 // pred_fallthru
        _
    $region6: #{multi_head_attention.3} parent=1 // loop_footer
      %s20 = sadd.s32 1, %s16
    $region7: #{multi_head_attention.3} parent=1 // loop_footer_branch
      %15 = sbr.rel target = $region3
    $region8: #{multi_head_attention.3} parent=1 // loop_exit
      _
    %633 = vsyncpa [#allocation4], 1
    %s634 = scalar_lea.sflag [#allocation4], 1
    %635 = vsyncpa %s634, 1

// kernel: multi_head_attention.2
$region0: #{multi_head_attention.2}
  #allocation0 [shape = 'u32[]', space=smem, size = 0x4, offset = 0x4, fixed_abs, tag = 'smem constant byte address 0x4 - core index']
  #allocation1 [shape = 'u32[144,128]{1,0:T(1,128)}', space=vmem, size = 0x12000, scoped, tag = 'internal scratch']
  #allocation2 [shape = 'f32[16,32]{1,0:T(8,128)}', space=vmem, size = 0x2000, scoped, tag = 'scratch operand']
  %s0 = inlined_call_operand.vmem [shape: bf16[3,16,32], index: 0, kind: input, shape index: {}]
  %s1 = inlined_call_operand.vmem [shape: bf16[3,32,32], index: 1, kind: input, shape index: {}]
  %s2 = inlined_call_operand.vmem [shape: f32[3,1,32], index: 2, kind: input, shape index: {}]
  %s3 = inlined_call_operand.vmem [shape: bf16[3,16,32], index: 3, kind: output, shape index: {}]
  %s4 = sld [smem:[#allocation0]]
  $region53: #{multi_head_attention.2} parent=0
    _
  %s6 = ssub.s32 1, %s4
  %s7 = scalar_select 0, %s6, %s4
  loop: start=0, step=1, limit=5
  $region2: #{multi_head_attention.2} parent=0 // loop_pre_header
    _
  $region3: #{multi_head_attention.2} parent=0 // loop_header
    %s9 = sphi 0, %s13
    %p10 = scmp.ge.s32.totalorder %s9, 5
    %s16 = sphi 0, %s42
    %s17 = sphi 0, %s38
    %s18 = sphi 0, %s34
    %s19 = sphi 0, %s30
    %s20 = sphi 0, %s16
    %s21 = sphi 0, %s17
    %s22 = sphi 0, %s18
    %s23 = sphi 0, %s19
    %s24 = sphi 0, %s20
    %s25 = sphi 0, %s21
    %s26 = sphi 0, %s22
    %s27 = sphi 0, %s23
    %s49 = sphi 0, %s51
    %s52 = sphi 0, %s49
    %s53 = sphi 0, %s52
    %s69 = sphi 0, %s53
    %s79 = sphi 0, %s81
    %s82 = sphi 0, %s79
    %s83 = sphi 0, %s82
    %s99 = sphi 0, %s83
    %s107 = sphi 0, %s109
    %s110 = sphi 0, %s107
    %s111 = sphi 0, %s110
    %s127 = sphi 0, %s111
    %s137 = sphi 0, %s139
    %s140 = sphi 0, %s137
    %s141 = sphi 0, %s140
    %s157 = sphi 0, %s141
  $region4: #{multi_head_attention.2} parent=0 // loop_header_branch
    %12 = sbr.rel (%p10) target = $region8
  $region5: #{multi_head_attention.2} parent=0 // loop_body
    %s14 = ssub.s32 %s9, 1
    %s15 = ssub.s32 %s9, 2
    %s28 = sadd.s32 1, %s19
    %p29 = scmp.ge.s32.totalorder %s28, 1
    %s30 = scalar_select %p29, 0, %s28
    %s31 = sadd.s32 1, %s18
    %s32 = scalar_select %p29, %s31, %s18
    %p33 = scmp.ge.s32.totalorder %s32, 1
    %s34 = scalar_select %p33, 0, %s32
    %s35 = sadd.s32 1, %s17
    %s36 = scalar_select %p33, %s35, %s17
    %p37 = scmp.ge.s32.totalorder %s36, 1
    %s38 = scalar_select %p37, 0, %s36
    %s39 = sadd.s32 1, %s16
    %s40 = scalar_select %p37, %s39, %s16
    %p41 = scmp.ge.s32.totalorder %s40, 3
    %s42 = scalar_select %p41, 0, %s40
    %s43 = ssub.s32 %s16, %s42
    %s44 = ssub.s32 %s17, %s38
    %s45 = sor.u32 %s43, %s44
    %s46 = ssub.s32 %s19, %s30
    %s47 = sor.u32 %s45, %s46
    %p48 = scmp.eq.s32.totalorder %s47, 0
    %s50 = sadd.s32 %s49, 1
    %s51 = scalar_select %p48, %s49, %s50
    %p54 = pneg %p48
    %p55 = scmp.eq.s32.totalorder %s9, 2
    %p56 = por %p54, %p55
    %p57 = scmp.ne.s32.totalorder %s49, %s52
    %p58 = scmp.eq.s32.totalorder %s9, 0
    %p59 = por %p57, %p58
    %p60 = scmp.ne.s32.totalorder %s49, %s52
    %p61 = scmp.eq.s32.totalorder %s14, 2
    %p62 = por %p60, %p61
    %p63 = scmp.ne.s32.totalorder %s52, %s53
    %p64 = scmp.eq.s32.totalorder %s14, 0
    %p65 = por %p63, %p64
    %p66 = scmp.ne.s32.totalorder %s52, %s53
    %p67 = scmp.eq.s32.totalorder %s15, 2
    %p68 = por %p66, %p67
    %p70 = scmp.ne.s32.totalorder %s53, %s69
    %p71 = scmp.eq.s32.totalorder %s15, 0
    %p72 = por %p70, %p71
    %s73 = ssub.s32 %s16, %s42
    %s74 = ssub.s32 %s19, %s30
    %s75 = sor.u32 %s73, %s74
    %s76 = ssub.s32 %s18, %s34
    %s77 = sor.u32 %s75, %s76
    %p78 = scmp.eq.s32.totalorder %s77, 0
    %s80 = sadd.s32 %s79, 1
    %s81 = scalar_select %p78, %s79, %s80
    %p84 = pneg %p78
    %p85 = scmp.eq.s32.totalorder %s9, 2
    %p86 = por %p84, %p85
    %p87 = scmp.ne.s32.totalorder %s79, %s82
    %p88 = scmp.eq.s32.totalorder %s9, 0
    %p89 = por %p87, %p88
    %p90 = scmp.ne.s32.totalorder %s79, %s82
    %p91 = scmp.eq.s32.totalorder %s14, 2
    %p92 = por %p90, %p91
    %p93 = scmp.ne.s32.totalorder %s82, %s83
    %p94 = scmp.eq.s32.totalorder %s14, 0
    %p95 = por %p93, %p94
    %p96 = scmp.ne.s32.totalorder %s82, %s83
    %p97 = scmp.eq.s32.totalorder %s15, 2
    %p98 = por %p96, %p97
    %p100 = scmp.ne.s32.totalorder %s83, %s99
    %p101 = scmp.eq.s32.totalorder %s15, 0
    %p102 = por %p100, %p101
    %s103 = ssub.s32 %s16, %s42
    %s104 = ssub.s32 %s18, %s34
    %s105 = sor.u32 %s103, %s104
    %p106 = scmp.eq.s32.totalorder %s105, 0
    %s108 = sadd.s32 %s107, 1
    %s109 = scalar_select %p106, %s107, %s108
    %p112 = pneg %p106
    %p113 = scmp.eq.s32.totalorder %s9, 2
    %p114 = por %p112, %p113
    %p115 = scmp.ne.s32.totalorder %s107, %s110
    %p116 = scmp.eq.s32.totalorder %s9, 0
    %p117 = por %p115, %p116
    %p118 = scmp.ne.s32.totalorder %s107, %s110
    %p119 = scmp.eq.s32.totalorder %s14, 2
    %p120 = por %p118, %p119
    %p121 = scmp.ne.s32.totalorder %s110, %s111
    %p122 = scmp.eq.s32.totalorder %s14, 0
    %p123 = por %p121, %p122
    %p124 = scmp.ne.s32.totalorder %s110, %s111
    %p125 = scmp.eq.s32.totalorder %s15, 2
    %p126 = por %p124, %p125
    %p128 = scmp.ne.s32.totalorder %s111, %s127
    %p129 = scmp.eq.s32.totalorder %s15, 0
    %p130 = por %p128, %p129
    %s131 = ssub.s32 %s16, %s42
    %s132 = ssub.s32 %s17, %s38
    %s133 = sor.u32 %s131, %s132
    %s134 = ssub.s32 %s18, %s34
    %s135 = sor.u32 %s133, %s134
    %p136 = scmp.eq.s32.totalorder %s135, 0
    %s138 = sadd.s32 %s137, 1
    %s139 = scalar_select %p136, %s137, %s138
    %p142 = pneg %p136
    %p143 = scmp.eq.s32.totalorder %s9, 2
    %p144 = por %p142, %p143
    %p145 = scmp.ne.s32.totalorder %s137, %s140
    %p146 = scmp.eq.s32.totalorder %s9, 0
    %p147 = por %p145, %p146
    %p148 = scmp.ne.s32.totalorder %s137, %s140
    %p149 = scmp.eq.s32.totalorder %s14, 2
    %p150 = por %p148, %p149
    %p151 = scmp.ne.s32.totalorder %s140, %s141
    %p152 = scmp.eq.s32.totalorder %s14, 0
    %p153 = por %p151, %p152
    %p154 = scmp.ne.s32.totalorder %s140, %s141
    %p155 = scmp.eq.s32.totalorder %s15, 2
    %p156 = por %p154, %p155
    %p158 = scmp.ne.s32.totalorder %s141, %s157
    %p159 = scmp.eq.s32.totalorder %s15, 0
    %p160 = por %p158, %p159
    %p161 = scmp.le.s32.totalorder 1, %s9
    %p162 = scmp.lt.s32.totalorder %s9, 4
    %p163 = pnand %p161, %p162
    %p164 = pneg %p163
    // Predicated region
    $region9: #{multi_head_attention.2} parent=5 // pred_check
      _
    $region10: #{multi_head_attention.2} parent=5 // pred_check_branch
      %166 = sbr.rel (%p163) target = $region12
    $region11: #{multi_head_attention.2} parent=5 // pred_region
      %s167 = ssub.s32 %s9, 1
    $region12: #{multi_head_attention.2} parent=5 // pred_fallthru
      _
    %p168 = scmp.lt.s32.totalorder %s9, 3
    // Predicated region
    $region13: #{multi_head_attention.2} parent=5 // pred_check
      %p169 = pneg %p168
    $region14: #{multi_head_attention.2} parent=5 // pred_check_branch
      %171 = sbr.rel (%p169) target = $region16
    $region15: #{multi_head_attention.2} parent=5 // pred_region
      // Predicated region
      $region17: #{multi_head_attention.2} parent=15 // pred_check
        %p172 = pneg %p59
      $region18: #{multi_head_attention.2} parent=15 // pred_check_branch
        %174 = sbr.rel (%p172) target = $region20
      $region19: #{multi_head_attention.2} parent=15 // pred_region
        %s175 = smul.u32 2, %s17
        %p176 = scmp.lt.s32.totalorder %s16, 2
        %s177 = scalar_select %p176, %s16, 2
        %p178 = scmp.lt.s32.totalorder %s175, 1
        %s179 = scalar_select %p178, %s175, 1
        %p180 = scmp.lt.s32.totalorder %s19, 0
        %s181 = scalar_select %p180, %s19, 0
        %s182 = sadd.s32 %s181, %s179
        %s183 = smul.addr %s177, 2
        %s184 = sadd.s32 %s182, %s183
        %s185 = smul.addr %s184, 4
        %s186 = scalar_lea.vmem %s0, %s185
        %s187 = smul.u32 2, %s17
      $region20: #{multi_head_attention.2} parent=15 // pred_fallthru
        _
      // Predicated region
      $region21: #{multi_head_attention.2} parent=15 // pred_check
        %p188 = pneg %p89
      $region22: #{multi_head_attention.2} parent=15 // pred_check_branch
        %190 = sbr.rel (%p188) target = $region24
      $region23: #{multi_head_attention.2} parent=15 // pred_region
        %s191 = smul.u32 4, %s19
        %p192 = scmp.lt.s32.totalorder %s16, 2
        %s193 = scalar_select %p192, %s16, 2
        %p194 = scmp.lt.s32.totalorder %s191, 3
        %s195 = scalar_select %p194, %s191, 3
        %p196 = scmp.lt.s32.totalorder %s18, 0
        %s197 = scalar_select %p196, %s18, 0
        %s198 = sadd.s32 %s197, %s195
        %s199 = smul.addr %s193, 4
        %s200 = sadd.s32 %s198, %s199
        %s201 = smul.addr %s200, 4
        %s202 = scalar_lea.vmem %s1, %s201
        %s203 = smul.u32 4, %s19
      $region24: #{multi_head_attention.2} parent=15 // pred_fallthru
        _
      // Predicated region
      $region25: #{multi_head_attention.2} parent=15 // pred_check
        %p204 = pneg %p117
      $region26: #{multi_head_attention.2} parent=15 // pred_check_branch
        %206 = sbr.rel (%p204) target = $region28
      $region27: #{multi_head_attention.2} parent=15 // pred_region
        %p207 = scmp.lt.s32.totalorder %s16, 2
        %s208 = scalar_select %p207, %s16, 2
        %p209 = scmp.lt.s32.totalorder %s18, 0
        %s210 = scalar_select %p209, %s18, 0
        %s211 = sadd.s32 %s210, %s208
        %s212 = scalar_lea.vmem %s2, %s211
      $region28: #{multi_head_attention.2} parent=15 // pred_fallthru
        _
    $region16: #{multi_head_attention.2} parent=5 // pred_fallthru
      _
    %p213 = scmp.le.s32.totalorder 1, %s9
    %p214 = scmp.lt.s32.totalorder %s9, 4
    %p215 = pnand %p213, %p214
    %p216 = pneg %p215
    // Predicated region
    $region29: #{multi_head_attention.2} parent=5 // pred_check
      _
    $region30: #{multi_head_attention.2} parent=5 // pred_check_branch
      %218 = sbr.rel (%p215) target = $region32
    $region31: #{multi_head_attention.2} parent=5 // pred_region
      %s219 = ssub.s32 %s9, 1
      %s220 = smul.u32 2, %s21
      %p221 = scmp.lt.s32.totalorder %s20, 2
      %s222 = scalar_select %p221, %s20, 2
      %p223 = scmp.lt.s32.totalorder %s220, 1
      %s224 = scalar_select %p223, %s220, 1
      %p225 = scmp.lt.s32.totalorder %s23, 0
      %s226 = scalar_select %p225, %s23, 0
      %s227 = sadd.s32 %s226, %s224
      %s228 = smul.addr %s222, 2
      %s229 = sadd.s32 %s227, %s228
      %s230 = smul.addr %s229, 4
      %s231 = scalar_lea.vmem %s0, %s230
      %p232 = pneg %p65
      %p233 = pneg %p62
      %s234 = smul.u32 4, %s23
      %p235 = scmp.lt.s32.totalorder %s20, 2
      %s236 = scalar_select %p235, %s20, 2
      %p237 = scmp.lt.s32.totalorder %s234, 3
      %s238 = scalar_select %p237, %s234, 3
      %p239 = scmp.lt.s32.totalorder %s22, 0
      %s240 = scalar_select %p239, %s22, 0
      %s241 = sadd.s32 %s240, %s238
      %s242 = smul.addr %s236, 4
      %s243 = sadd.s32 %s241, %s242
      %s244 = smul.addr %s243, 4
      %s245 = scalar_lea.vmem %s1, %s244
      %p246 = pneg %p95
      %p247 = pneg %p92
      %p248 = scmp.lt.s32.totalorder %s20, 2
      %s249 = scalar_select %p248, %s20, 2
      %p250 = scmp.lt.s32.totalorder %s22, 0
      %s251 = scalar_select %p250, %s22, 0
      %s252 = sadd.s32 %s251, %s249
      %s253 = scalar_lea.vmem %s2, %s252
      %p254 = pneg %p123
      %p255 = pneg %p120
      %p256 = pneg %p153
      %p257 = pneg %p150
      %s258 = smul.u32 2, %s21
      %p259 = scmp.lt.s32.totalorder %s20, 2
      %s260 = scalar_select %p259, %s20, 2
      %p261 = scmp.lt.s32.totalorder %s258, 1
      %s262 = scalar_select %p261, %s258, 1
      %p263 = scmp.lt.s32.totalorder %s22, 0
      %s264 = scalar_select %p263, %s22, 0
      %s265 = sadd.s32 %s264, %s262
      %s266 = smul.addr %s260, 2
      %s267 = sadd.s32 %s265, %s266
      %s268 = smul.addr %s267, 4
      %s269 = scalar_lea.vmem %s3, %s268
      %s270 = smul.u32 2, %s21
      %p271 = scmp.lt.s32.totalorder %s20, 2
      %s272 = scalar_select %p271, %s20, 2
      %p273 = scmp.lt.s32.totalorder %s270, 1
      %s274 = scalar_select %p273, %s270, 1
      %p275 = scmp.lt.s32.totalorder %s23, 0
      %s276 = scalar_select %p275, %s23, 0
      %s277 = sadd.s32 %s276, %s274
      %s278 = smul.addr %s272, 2
      %s279 = sadd.s32 %s277, %s278
      %s280 = smul.addr %s279, 4
      %s281 = scalar_lea.vmem %s0, %s280
      %s282 = smul.u32 2, %s21
      %s283 = smul.u32 4, %s23
      %p284 = scmp.lt.s32.totalorder %s20, 2
      %s285 = scalar_select %p284, %s20, 2
      %p286 = scmp.lt.s32.totalorder %s283, 3
      %s287 = scalar_select %p286, %s283, 3
      %p288 = scmp.lt.s32.totalorder %s22, 0
      %s289 = scalar_select %p288, %s22, 0
      %s290 = sadd.s32 %s289, %s287
      %s291 = smul.addr %s285, 4
      %s292 = sadd.s32 %s290, %s291
      %s293 = smul.addr %s292, 4
      %s294 = scalar_lea.vmem %s1, %s293
      %s295 = smul.u32 4, %s23
      %p296 = scmp.lt.s32.totalorder %s20, 2
      %s297 = scalar_select %p296, %s20, 2
      %p298 = scmp.lt.s32.totalorder %s22, 0
      %s299 = scalar_select %p298, %s22, 0
      %s300 = sadd.s32 %s299, %s297
      %s301 = scalar_lea.vmem %s2, %s300
      %s302 = smul.u32 2, %s21
      %p303 = scmp.lt.s32.totalorder %s20, 2
      %s304 = scalar_select %p303, %s20, 2
      %p305 = scmp.lt.s32.totalorder %s302, 1
      %s306 = scalar_select %p305, %s302, 1
      %p307 = scmp.lt.s32.totalorder %s22, 0
      %s308 = scalar_select %p307, %s22, 0
      %s309 = sadd.s32 %s308, %s306
      %s310 = smul.addr %s304, 2
      %s311 = sadd.s32 %s309, %s310
      %s312 = smul.addr %s311, 4
      %s313 = scalar_lea.vmem %s3, %s312
      %s314 = smul.u32 2, %s21
      %p316 = scmp.eq.s32.totalorder %s23, 0
      // Predicated region
      $region33: #{multi_head_attention.2} parent=31 // pred_check
        %p317 = pneg %p316
      $region34: #{multi_head_attention.2} parent=31 // pred_check_branch
        %319 = sbr.rel (%p317) target = $region36
      $region35: #{multi_head_attention.2} parent=31 // pred_region
        %vm320 = vcmask 261120
        %321 = vst.msk [vmem:[#allocation2] sm:$0xff] %vm320, 0.0
        %322 = vst.msk [vmem:[#allocation2 + $0x8] sm:$0xff] %vm320, 0.0
      $region36: #{multi_head_attention.2} parent=31 // pred_fallthru
        _
      %v323 = vld [vmem:[#allocation2] sm:$0xff]
      %v324 = vld [vmem:[#allocation2 + $0x8] sm:$0xff]
      %v325 = vld [vmem:[%s281] sm:$0xf]
      %v326 = vld [vmem:[%s281 + $0x4] sm:$0xf]
      %v327 = vld [vmem:[%s294] sm:$0xf]
      %v328 = vld [vmem:[%s294 + $0x4] sm:$0xf]
      %v329 = vld [vmem:[%s294 + $0x8] sm:$0xf]
      %v330 = vld [vmem:[%s294 + $0xc] sm:$0xf]
      %v333 = vunpack.c.l.b16 %v325
      %v334 = vunpack.c.l.b16 %v326
      %v335 = vpack.c.b16 %v334, %v333
      %v340 = vunpack.c.l.b16 %v327
      %v341 = vunpack.c.l.b16 %v328
      %v342 = vunpack.c.l.b16 %v329
      %v343 = vunpack.c.l.b16 %v330
      %v344 = vpack.c.b16 %v341, %v340
      %v345 = vpack.c.b16 %v343, %v342
      %vm348 = vcmask 261120
      %v350 = vsel %vm348, %v335, 0
      %352 = vmatprep.subr.bf16.mxu0 0
      %353 = vmatpush1.bf16.msra.mxu0 %v344
      %354 = vmatprep.subr.bf16.mxu0 0
      %355 = vmatpush1.bf16.msra.mxu0 %v345
      %356 = vmatprep.subr.bf16.mxu0 0
      %357 = vmatpush1.bf16.msra.mxu0 0
      %358 = vmatprep.subr.bf16.mxu0 0
      %359 = vmatpush1.bf16.msra.mxu0 0
      %360 = vmatprep.subr.bf16.mxu0 0
      %361 = vmatpush1.bf16.msra.mxu0 0
      %362 = vmatprep.subr.bf16.mxu0 0
      %363 = vmatpush1.bf16.msra.mxu0 0
      %364 = vmatprep.subr.bf16.mxu0 0
      %365 = vmatpush1.bf16.msra.mxu0 0
      %366 = vmatprep.subr.bf16.mxu0 0
      %367 = vmatpush1.bf16.msra.mxu0 0
      %368 = vmatprep.subr.bf16.mxu0 0
      %369 = vmatpush1.bf16.msra.mxu0 0
      %370 = vmatprep.subr.bf16.mxu0 0
      %371 = vmatpush1.bf16.msra.mxu0 0
      %372 = vmatprep.subr.bf16.mxu0 0
      %373 = vmatpush1.bf16.msra.mxu0 0
      %374 = vmatprep.subr.bf16.mxu0 0
      %375 = vmatpush1.bf16.msra.mxu0 0
      %376 = vmatprep.subr.bf16.mxu0 0
      %377 = vmatpush1.bf16.msra.mxu0 0
      %378 = vmatprep.subr.bf16.mxu0 0
      %379 = vmatpush1.bf16.msra.mxu0 0
      %380 = vmatprep.subr.bf16.mxu0 0
      %381 = vmatpush1.bf16.msra.mxu0 0
      %382 = vmatprep.subr.bf16.mxu0 0
      %383 = vmatpush1.bf16.msra.mxu0 0
      %384 = vmatprep.mubr.bf16.mxu0 0
      %385 = vmatmul.mubr.bf16.gmra.mrb[0].mxu0 %v350
      %v386 = vpop.f32.mrb[0].mxu0
      %v387 = vadd.f32 0.0, %v386
      %v388 = vpop.f32.mrb[0].mxu0
      %v389 = vpop.f32.mrb[0].mxu0
      %v390 = vadd.f32 0.0, %v389
      %v391 = vpop.f32.mrb[0].mxu0
      %392 = vdwg.mxu0
      %v393 = vadd.f32 %v323, %v387
      %v394 = vadd.f32 %v324, %v390
      %395 = vst.msk [vmem:[#allocation2] sm:$0xff] %vm348, %v393
      %396 = vst.msk [vmem:[#allocation2 + $0x8] sm:$0xff] %vm348, %v394
      // Predicated region
      $region37: #{multi_head_attention.2} parent=31 // pred_check
        %p397 = pneg %p316
      $region38: #{multi_head_attention.2} parent=31 // pred_check_branch
        %399 = sbr.rel (%p397) target = $region40
      $region39: #{multi_head_attention.2} parent=31 // pred_region
        %v400 = vld [vmem:[#allocation2] sm:$0xff]
        %v401 = vld [vmem:[#allocation2 + $0x8] sm:$0xff]
        %v402 = vld [vmem:[%s301] sm:$0x1]
        %v404 = vlaneseq
        %v405 = vshrl.u32 %v404, 7
        %v406 = vsub.s32 0, %v405
        %v407 = vrot.slane %v402, %v406
        %v409 = vadd.f32 %v400, %v407
        %v410 = vadd.f32 %v401, %v407
        %v411 = vpack.c.bf16 %v410, %v409
        %v413 = vunpack.c.l.b16 %v411
        %v414 = vunpack.c.h.b16 %v411
        %v415 = vpack.c.b16 %v413, %v413
        %v416 = vpack.c.b16 %v414, %v414
        %vm419 = vcmask 257024
        %420 = vst.msk [vmem:[%s313] sm:$0xf] %vm419, %v415
        %421 = vst.msk [vmem:[%s313 + $0x4] sm:$0xf] %vm419, %v416
      $region40: #{multi_head_attention.2} parent=31 // pred_fallthru
        _
      %s422 = smul.u32 2, %s21
      %p423 = scmp.lt.s32.totalorder %s20, 2
      %s424 = scalar_select %p423, %s20, 2
      %p425 = scmp.lt.s32.totalorder %s422, 1
      %s426 = scalar_select %p425, %s422, 1
      %p427 = scmp.lt.s32.totalorder %s22, 0
      %s428 = scalar_select %p427, %s22, 0
      %s429 = sadd.s32 %s428, %s426
      %s430 = smul.addr %s424, 2
      %s431 = sadd.s32 %s429, %s430
      %s432 = smul.addr %s431, 4
      %s433 = scalar_lea.vmem %s3, %s432
      // Predicated region
      $region41: #{multi_head_attention.2} parent=31 // pred_check
        %p434 = pneg %p150
      $region42: #{multi_head_attention.2} parent=31 // pred_check_branch
        %436 = sbr.rel (%p434) target = $region44
      $region43: #{multi_head_attention.2} parent=31 // pred_region
        %s437 = smul.u32 2, %s21
      $region44: #{multi_head_attention.2} parent=31 // pred_fallthru
        _
    $region32: #{multi_head_attention.2} parent=5 // pred_fallthru
      _
    %p438 = scmp.le.s32.totalorder 2, %s9
    // Predicated region
    $region45: #{multi_head_attention.2} parent=5 // pred_check
      %p439 = pneg %p438
    $region46: #{multi_head_attention.2} parent=5 // pred_check_branch
      %441 = sbr.rel (%p439) target = $region48
    $region47: #{multi_head_attention.2} parent=5 // pred_region
      %s442 = ssub.s32 %s9, 2
      // Predicated region
      $region49: #{multi_head_attention.2} parent=47 // pred_check
        %p443 = pneg %p156
      $region50: #{multi_head_attention.2} parent=47 // pred_check_branch
        %445 = sbr.rel (%p443) target = $region52
      $region51: #{multi_head_attention.2} parent=47 // pred_region
        %s446 = smul.u32 2, %s25
        %p447 = scmp.lt.s32.totalorder %s24, 2
        %s448 = scalar_select %p447, %s24, 2
        %p449 = scmp.lt.s32.totalorder %s446, 1
        %s450 = scalar_select %p449, %s446, 1
        %p451 = scmp.lt.s32.totalorder %s26, 0
        %s452 = scalar_select %p451, %s26, 0
        %s453 = sadd.s32 %s452, %s450
        %s454 = smul.addr %s448, 2
        %s455 = sadd.s32 %s453, %s454
        %s456 = smul.addr %s455, 4
        %s457 = scalar_lea.vmem %s3, %s456
      $region52: #{multi_head_attention.2} parent=47 // pred_fallthru
        _
    $region48: #{multi_head_attention.2} parent=5 // pred_fallthru
      _
  $region6: #{multi_head_attention.2} parent=0 // loop_footer
    %s13 = sadd.s32 1, %s9
  $region7: #{multi_head_attention.2} parent=0 // loop_footer_branch
    %8 = sbr.rel target = $region3
  $region8: #{multi_head_attention.2} parent=0 // loop_exit
    _

</llo_original>
